<compile_context>
chip_gen: v7x
topology: tpu7x:2x2x1
jax: 0.10.0
libtpu: 0.0.40
codegen_flags: <defaults>
</compile_context>

<pallas_src>
import jax
import jax.numpy as jnp
from jax import lax
from jax.experimental import pallas as pl
from jax.experimental.pallas import tpu as pltpu


def mlp_kernel(x_ref,             # (TB, D)   f32  (natural layout, batch on sublanes)
               w1_ref, b1_ref,    # (128, D)  bf16, (128, 1) f32
               w2_ref, b2_ref,    # (64, 128) bf16, (64, 1)  f32
               w3_ref, b3_ref,    # (32, 64)  bf16, (32, 1)  f32
               w4_ref, b4_ref,    # (32, 1)   f32,  (1, 1)   f32
               out_ref):          # (1, TB)   f32  (batch on lanes, lane-dense)
    # In-kernel f32 -> bf16 cast on the VPU (avoids any wrapper pass over x).
    xb = x_ref[...].astype(jnp.bfloat16)

    # Layer 1: contract D of W1(128, D) with D of x(TB, D) -> (128, TB).  Batch moves to lanes.
    h = lax.dot_general(w1_ref[...], xb, (((1,), (1,)), ((), ())),
                        preferred_element_type=jnp.float32)
    h = jnp.maximum(h + b1_ref[...], 0.0)
    # (Dropout -> identity at inference)

    # Layer 2: (64, 128) @ (128, TB) -> (64, TB)
    h = jnp.dot(w2_ref[...], h.astype(jnp.bfloat16),
                preferred_element_type=jnp.float32)
    h = jnp.maximum(h + b2_ref[...], 0.0)
    # (Dropout -> identity at inference)

    # Layer 3: (32, 64) @ (64, TB) -> (32, TB)
    h = jnp.dot(w3_ref[...], h.astype(jnp.bfloat16),
                preferred_element_type=jnp.float32)
    h = jnp.maximum(h + b3_ref[...], 0.0)

    # Layer 4 (32 -> 1): VPU broadcast-multiply + XLU sublane reduction -> lane-dense (1, TB).
    out_ref[...] = (jnp.sum(h * w4_ref[...], axis=0, keepdims=True)
                    + b4_ref[...]).astype(out_ref.dtype)


def _pick_tile_and_vmem(B, D, tb_target):
    """Generation-aware batch-tile / VMEM-limit selection."""
    try:
        vmem_cap = int(pltpu.get_tpu_info().vmem_capacity_bytes)
    except Exception:
        vmem_cap = 64 << 20  # conservative: v7x per-TensorCore physical VMEM

    def footprint(tb):
        x_tile = 2 * tb * D * 4                              # double-buffered f32 x tile
        x_cast = tb * D * 2                                  # in-kernel bf16 copy
        weights = 2 * (128 * D + 128 * 64 + 64 * 32) * 2     # bf16 weights (assume 2 bufs)
        biases = (128 + 64 + 32 + 32 + 1) * 4 * 2
        acts = tb * (128 + 64 + 32) * 4 * 2                  # f32 activations + bf16 copies
        out_tile = 2 * tb * 4
        return x_tile + x_cast + weights + biases + acts + out_tile

    budget = int(0.70 * vmem_cap)
    tb = tb_target
    while tb > 256 and footprint(tb) > budget:
        tb //= 2                                             # stays a multiple of 128

    b8 = ((B + 7) // 8) * 8                                  # sublane-aligned single tile
    if b8 <= tb:
        tb = b8                                              # one (possibly ragged) tile

    vmem_limit = int(min(0.9 * vmem_cap, max(32 << 20, footprint(tb) + (8 << 20))))
    return tb, vmem_limit


def mlp_classifier_forward(x, params, *, tb_target=2048):
    """x: (B, input_dim) float32, params in PyTorch (out, in) layout. Returns (B,) float32."""
    B, D = x.shape
    (w1, b1), (w2, b2), (w3, b3), (w4, b4) = params

    tb, vmem_limit = _pick_tile_and_vmem(B, D, tb_target)
    num_tiles = pl.cdiv(B, tb)
    b_out = num_tiles * tb                                   # padded output columns sliced off

    # Weights stay in PyTorch (out, in) layout; matmul weights cast to bf16 (cheap, tiny).
    w1b, w2b, w3b = (w.astype(jnp.bfloat16) for w in (w1, w2, w3))
    b1c, b2c, b3c = (b.reshape(-1, 1) for b in (b1, b2, b3))   # (out, 1) f32
    w4c = w4.reshape(-1, 1)                                    # (32, 1)  f32 (VPU path)
    b4c = b4.reshape(1, 1)                                     # (1, 1)   f32

    # Weights/biases: constant index_map -> VMEM-resident across all grid steps.
    resident = lambda arr: pl.BlockSpec(arr.shape, lambda i: (0, 0))

    flops = 2 * B * (D * 128 + 128 * 64 + 64 * 32 + 32)
    bytes_accessed = int(x.size * 4 + B * 4
                         + (w1.size + w2.size + w3.size) * 2
                         + (w4.size + b1.size + b2.size + b3.size + b4.size) * 4)

    out = pl.pallas_call(
        mlp_kernel,
        out_shape=jax.ShapeDtypeStruct((1, b_out), jnp.float32),
        grid=(num_tiles,),
        in_specs=[
            pl.BlockSpec((tb, D), lambda i: (i, 0)),        # x tile, natural layout, pipelined
            resident(w1b), resident(b1c),
            resident(w2b), resident(b2c),
            resident(w3b), resident(b3c),
            resident(w4c), resident(b4c),
        ],
        out_specs=pl.BlockSpec((1, tb), lambda i: (0, i)),   # lane-dense output slab
        compiler_params=pltpu.CompilerParams(
            dimension_semantics=("parallel",),               # megacore sharding over batch tiles
            vmem_limit_bytes=vmem_limit),                    # explicit (v5e default is 16 MiB)
        cost_estimate=pl.CostEstimate(flops=flops, transcendentals=0,
                                      bytes_accessed=bytes_accessed),
    )(x, w1b, b1c, w2b, b2c, w3b, b3c, w4c, b4c)

    return out[0, :B]  # matches .squeeze(1)


def init_params(key, input_dim):
    """Deterministic init mimicking nn.Linear; weights in PyTorch (out, in) layout."""
    dims = [(input_dim, 128), (128, 64), (64, 32), (32, 1)]
    params = []
    for fan_in, fan_out in dims:
        key, kw, kb = jax.random.split(key, 3)
        bound = 1.0 / jnp.sqrt(fan_in)
        w = jax.random.uniform(kw, (fan_out, fan_in), jnp.float32, -bound, bound)
        b = jax.random.uniform(kb, (fan_out,), jnp.float32, -bound, bound)
        params.append((w, b))
    return params


def reference_forward(x, params):
    """Pure-JAX reference matching the kernel's numerics (bf16 matmul inputs, f32 accumulate)."""
    (w1, b1), (w2, b2), (w3, b3), (w4, b4) = params
    h = jnp.dot(x.astype(jnp.bfloat16), w1.astype(jnp.bfloat16).T,
                preferred_element_type=jnp.float32) + b1
    h = jnp.maximum(h, 0.0)
    h = jnp.dot(h.astype(jnp.bfloat16), w2.astype(jnp.bfloat16).T,
                preferred_element_type=jnp.float32) + b2
    h = jnp.maximum(h, 0.0)
    h = jnp.dot(h.astype(jnp.bfloat16), w3.astype(jnp.bfloat16).T,
                preferred_element_type=jnp.float32) + b3
    h = jnp.maximum(h, 0.0)
    h = jnp.dot(h, w4.T) + b4        # f32, matches the in-kernel VPU reduction
    return h[:, 0]


if __name__ == "__main__":
    key = jax.random.PRNGKey(0)
    k_x, k_p = jax.random.split(key)

    batch, input_dim = 8, 32
    x = jax.random.normal(k_x, (batch, input_dim), dtype=jnp.float32)
    params = init_params(k_p, input_dim)

    y = mlp_classifier_forward(x, params)
    y = jax.block_until_ready(y)

    y_ref = reference_forward(x, params)
    assert y.shape == (batch,)
    assert jnp.allclose(y, y_ref, atol=1e-2, rtol=1e-2), (y, y_ref)

    print("KERNEL_OK")
</pallas_src>

<mosaic_0001>
module attributes {stable_mosaic.version = 11 : i64} {
  func.func @mlp_kernel(%arg0: i32, %arg1: memref<8x32xf32, #tpu.memory_space<vmem>>, %arg2: memref<128x32xbf16, #tpu.memory_space<vmem>>, %arg3: memref<128x1xf32, #tpu.memory_space<vmem>>, %arg4: memref<64x128xbf16, #tpu.memory_space<vmem>>, %arg5: memref<64x1xf32, #tpu.memory_space<vmem>>, %arg6: memref<32x64xbf16, #tpu.memory_space<vmem>>, %arg7: memref<32x1xf32, #tpu.memory_space<vmem>>, %arg8: memref<32x1xf32, #tpu.memory_space<vmem>>, %arg9: memref<1x1xf32, #tpu.memory_space<vmem>>, %arg10: memref<1x8xf32, #tpu.memory_space<vmem>>) attributes {dimension_semantics = [#tpu.dimension_semantics<parallel>], iteration_bounds = array<i64: 1>, scalar_prefetch = 0 : i64, scratch_operands = 0 : i64, tpu.core_type = #tpu.core_type<tc>, window_params = [{transform_indices = @transform_0, window_bounds = array<i64: 8, 32>}, {pipeline_mode = #tpu.pipeline_mode<synchronous>, transform_indices = @transform_1, window_bounds = array<i64: 128, 32>}, {pipeline_mode = #tpu.pipeline_mode<synchronous>, transform_indices = @transform_2, window_bounds = array<i64: 128, 1>}, {pipeline_mode = #tpu.pipeline_mode<synchronous>, transform_indices = @transform_3, window_bounds = array<i64: 64, 128>}, {pipeline_mode = #tpu.pipeline_mode<synchronous>, transform_indices = @transform_4, window_bounds = array<i64: 64, 1>}, {pipeline_mode = #tpu.pipeline_mode<synchronous>, transform_indices = @transform_5, window_bounds = array<i64: 32, 64>}, {pipeline_mode = #tpu.pipeline_mode<synchronous>, transform_indices = @transform_6, window_bounds = array<i64: 32, 1>}, {pipeline_mode = #tpu.pipeline_mode<synchronous>, transform_indices = @transform_7, window_bounds = array<i64: 32, 1>}, {pipeline_mode = #tpu.pipeline_mode<synchronous>, transform_indices = @transform_8, window_bounds = array<i64: 1, 1>}, {transform_indices = @transform_9, window_bounds = array<i64: 1, 8>}]} {
    %c0 = arith.constant 0 : index
    %c0_0 = arith.constant 0 : index
    %0 = vector.load %arg1[%c0, %c0_0] : memref<8x32xf32, #tpu.memory_space<vmem>>, vector<8x32xf32>
    %1 = arith.truncf %0 : vector<8x32xf32> to vector<8x32xbf16>
    %c0_1 = arith.constant 0 : index
    %c0_2 = arith.constant 0 : index
    %2 = vector.load %arg2[%c0_1, %c0_2] : memref<128x32xbf16, #tpu.memory_space<vmem>>, vector<128x32xbf16>
    %cst = arith.constant dense<0.000000e+00> : vector<128x8xf32>
    %3 = tpu.matmul %2, %1, %cst {dimension_numbers = #tpu.dot_dimension_numbers<[1], [1], [0], [0], [0, 0, 1, 0], [], []>} : vector<128x32xbf16>, vector<8x32xbf16>, vector<128x8xf32> -> vector<128x8xf32>
    %c0_3 = arith.constant 0 : index
    %c0_4 = arith.constant 0 : index
    %4 = vector.load %arg3[%c0_3, %c0_4] : memref<128x1xf32, #tpu.memory_space<vmem>>, vector<128x1xf32>
    %5 = vector.broadcast %4 : vector<128x1xf32> to vector<128x8xf32>
    %6 = arith.addf %3, %5 : vector<128x8xf32>
    %cst_5 = arith.constant 0.000000e+00 : f32
    %7 = vector.broadcast %cst_5 : f32 to vector<128x8xf32>
    %8 = arith.maximumf %6, %7 : vector<128x8xf32>
    %c0_6 = arith.constant 0 : index
    %c0_7 = arith.constant 0 : index
    %9 = vector.load %arg4[%c0_6, %c0_7] : memref<64x128xbf16, #tpu.memory_space<vmem>>, vector<64x128xbf16>
    %10 = arith.truncf %8 : vector<128x8xf32> to vector<128x8xbf16>
    %cst_8 = arith.constant dense<0.000000e+00> : vector<64x8xf32>
    %11 = tpu.matmul %9, %10, %cst_8 {dimension_numbers = #tpu.dot_dimension_numbers<[1], [0], [0], [1], [0, 0, 1, 1], [], []>} : vector<64x128xbf16>, vector<128x8xbf16>, vector<64x8xf32> -> vector<64x8xf32>
    %c0_9 = arith.constant 0 : index
    %c0_10 = arith.constant 0 : index
    %12 = vector.load %arg5[%c0_9, %c0_10] : memref<64x1xf32, #tpu.memory_space<vmem>>, vector<64x1xf32>
    %13 = vector.broadcast %12 : vector<64x1xf32> to vector<64x8xf32>
    %14 = arith.addf %11, %13 : vector<64x8xf32>
    %cst_11 = arith.constant 0.000000e+00 : f32
    %15 = vector.broadcast %cst_11 : f32 to vector<64x8xf32>
    %16 = arith.maximumf %14, %15 : vector<64x8xf32>
    %c0_12 = arith.constant 0 : index
    %c0_13 = arith.constant 0 : index
    %17 = vector.load %arg6[%c0_12, %c0_13] : memref<32x64xbf16, #tpu.memory_space<vmem>>, vector<32x64xbf16>
    %18 = arith.truncf %16 : vector<64x8xf32> to vector<64x8xbf16>
    %cst_14 = arith.constant dense<0.000000e+00> : vector<32x8xf32>
    %19 = tpu.matmul %17, %18, %cst_14 {dimension_numbers = #tpu.dot_dimension_numbers<[1], [0], [0], [1], [0, 0, 1, 1], [], []>} : vector<32x64xbf16>, vector<64x8xbf16>, vector<32x8xf32> -> vector<32x8xf32>
    %c0_15 = arith.constant 0 : index
    %c0_16 = arith.constant 0 : index
    %20 = vector.load %arg7[%c0_15, %c0_16] : memref<32x1xf32, #tpu.memory_space<vmem>>, vector<32x1xf32>
    %21 = vector.broadcast %20 : vector<32x1xf32> to vector<32x8xf32>
    %22 = arith.addf %19, %21 : vector<32x8xf32>
    %cst_17 = arith.constant 0.000000e+00 : f32
    %23 = vector.broadcast %cst_17 : f32 to vector<32x8xf32>
    %24 = arith.maximumf %22, %23 : vector<32x8xf32>
    %c0_18 = arith.constant 0 : index
    %c0_19 = arith.constant 0 : index
    %25 = vector.load %arg8[%c0_18, %c0_19] : memref<32x1xf32, #tpu.memory_space<vmem>>, vector<32x1xf32>
    %26 = vector.broadcast %25 : vector<32x1xf32> to vector<32x8xf32>
    %27 = arith.mulf %24, %26 : vector<32x8xf32>
    %cst_20 = arith.constant dense<0.000000e+00> : vector<8xf32>
    %28 = vector.multi_reduction <add>, %27, %cst_20 [0] : vector<32x8xf32> to vector<8xf32>
    %29 = vector.shape_cast %28 : vector<8xf32> to vector<1x8xf32>
    %c0_21 = arith.constant 0 : index
    %c0_22 = arith.constant 0 : index
    %30 = vector.load %arg9[%c0_21, %c0_22] : memref<1x1xf32, #tpu.memory_space<vmem>>, vector<1x1xf32>
    %31 = vector.broadcast %30 : vector<1x1xf32> to vector<1x8xf32>
    %32 = arith.addf %29, %31 : vector<1x8xf32>
    %c0_23 = arith.constant 0 : index
    %c0_24 = arith.constant 0 : index
    %33 = vector.load %arg10[%c0_23, %c0_24] : memref<1x8xf32, #tpu.memory_space<vmem>>, vector<1x8xf32>
    tpu.vector_store %arg10[%c0_23, %c0_24], %32 {strides = array<i32>} : memref<1x8xf32, #tpu.memory_space<vmem>>, vector<1x8xf32>,
    return
  }
  func.func @transform_0(%arg0: i32) -> (i32, i32) {
    %c0_i32 = arith.constant 0 : i32
    %c0_i32_0 = arith.constant 0 : i32
    return %arg0, %c0_i32 : i32, i32
  }
  func.func @transform_1(%arg0: i32) -> (i32, i32) {
    %c0_i32 = arith.constant 0 : i32
    %c0_i32_0 = arith.constant 0 : i32
    %c0_i32_1 = arith.constant 0 : i32
    return %c0_i32, %c0_i32_0 : i32, i32
  }
  func.func @transform_2(%arg0: i32) -> (i32, i32) {
    %c0_i32 = arith.constant 0 : i32
    %c0_i32_0 = arith.constant 0 : i32
    %c0_i32_1 = arith.constant 0 : i32
    return %c0_i32, %c0_i32_0 : i32, i32
  }
  func.func @transform_3(%arg0: i32) -> (i32, i32) {
    %c0_i32 = arith.constant 0 : i32
    %c0_i32_0 = arith.constant 0 : i32
    %c0_i32_1 = arith.constant 0 : i32
    return %c0_i32, %c0_i32_0 : i32, i32
  }
  func.func @transform_4(%arg0: i32) -> (i32, i32) {
    %c0_i32 = arith.constant 0 : i32
    %c0_i32_0 = arith.constant 0 : i32
    %c0_i32_1 = arith.constant 0 : i32
    return %c0_i32, %c0_i32_0 : i32, i32
  }
  func.func @transform_5(%arg0: i32) -> (i32, i32) {
    %c0_i32 = arith.constant 0 : i32
    %c0_i32_0 = arith.constant 0 : i32
    %c0_i32_1 = arith.constant 0 : i32
    return %c0_i32, %c0_i32_0 : i32, i32
  }
  func.func @transform_6(%arg0: i32) -> (i32, i32) {
    %c0_i32 = arith.constant 0 : i32
    %c0_i32_0 = arith.constant 0 : i32
    %c0_i32_1 = arith.constant 0 : i32
    return %c0_i32, %c0_i32_0 : i32, i32
  }
  func.func @transform_7(%arg0: i32) -> (i32, i32) {
    %c0_i32 = arith.constant 0 : i32
    %c0_i32_0 = arith.constant 0 : i32
    %c0_i32_1 = arith.constant 0 : i32
    return %c0_i32, %c0_i32_0 : i32, i32
  }
  func.func @transform_8(%arg0: i32) -> (i32, i32) {
    %c0_i32 = arith.constant 0 : i32
    %c0_i32_0 = arith.constant 0 : i32
    %c0_i32_1 = arith.constant 0 : i32
    return %c0_i32, %c0_i32_0 : i32, i32
  }
  func.func @transform_9(%arg0: i32) -> (i32, i32) {
    %c0_i32 = arith.constant 0 : i32
    %c0_i32_0 = arith.constant 0 : i32
    return %c0_i32, %arg0 : i32, i32
  }
}

</mosaic_0001>

<llo_original>
// kernel: tpu_custom_call.1
$region0: #{tpu_custom_call.1}
  #allocation0 [shape = 'u32[]', space=smem, size = 0x4, offset = 0x4, fixed_abs, tag = 'smem constant byte address 0x4 - core index']
  #allocation1 [shape = 'u32[144,128]{1,0:T(1,128)}', space=vmem, size = 0x12000, scoped, tag = 'internal scratch']
  #allocation2 [shape = 'f32[1,1]{1,0:T(1,128)S(1)}', space=vmem, size = 0x200, scoped, tag = 'scoped memory for tpu_custom_call.1']
  %s0 = inlined_call_operand.vmem [shape: f32[8,32], index: 0, kind: input, shape index: {}]
  %s1 = inlined_call_operand.vmem [shape: bf16[128,32], index: 1, kind: input, shape index: {}]
  %s2 = inlined_call_operand.vmem [shape: f32[128,1], index: 2, kind: input, shape index: {}]
  %s3 = inlined_call_operand.vmem [shape: bf16[64,128], index: 3, kind: input, shape index: {}]
  %s4 = inlined_call_operand.vmem [shape: f32[64,1], index: 4, kind: input, shape index: {}]
  %s5 = inlined_call_operand.vmem [shape: bf16[32,64], index: 5, kind: input, shape index: {}]
  %s6 = inlined_call_operand.vmem [shape: f32[32,1], index: 6, kind: input, shape index: {}]
  %s7 = inlined_call_operand.vmem [shape: f32[32,1], index: 7, kind: input, shape index: {}]
  %s8 = inlined_call_operand.<no memory space> [shape: f32[1,1], index: 8, kind: input, shape index: {}]
  %s9 = inlined_call_operand.hbm [shape: f32[1,8], index: 9, kind: output, shape index: {}]
  %s10 = sld [smem:[#allocation0]]
  $region46: #{tpu_custom_call.1} parent=0
    _
  %s12 = ssub.s32 1, %s10
  %s13 = scalar_select 0, %s12, %s10
  %v14 = vstv %s8
  %15 = vst [vmem:[#allocation2] sm:$0x1] %v14
  $region1: #{tpu_custom_call.1} parent=0
    #allocation3 [shape = 'u8[512]{0}', space=vmem, size = 0x400, scoped, tag = 'output window, operand 0, single buffered']
    #allocation4 [shape = 's32[1]{0}', space=sflag, size = 0x4, scoped, tag = 'scoped memory for tpu_custom_call.1']
    %16 = vsyncpa [#allocation4], 0
    // Predicated region
    $region2: #{tpu_custom_call.1} parent=1 // pred_check
      _
    $region3: #{tpu_custom_call.1} parent=1 // pred_check_branch
      %18 = sbr.rel (0) target = $region5
    $region4: #{tpu_custom_call.1} parent=1 // pred_region
      _
    $region5: #{tpu_custom_call.1} parent=1 // pred_fallthru
      _
    // Predicated region
    $region6: #{tpu_custom_call.1} parent=1 // pred_check
      _
    $region7: #{tpu_custom_call.1} parent=1 // pred_check_branch
      %20 = sbr.rel (0) target = $region9
    $region8: #{tpu_custom_call.1} parent=1 // pred_region
      _
    $region9: #{tpu_custom_call.1} parent=1 // pred_fallthru
      _
    // Predicated region
    $region10: #{tpu_custom_call.1} parent=1 // pred_check
      _
    $region11: #{tpu_custom_call.1} parent=1 // pred_check_branch
      %22 = sbr.rel (0) target = $region13
    $region12: #{tpu_custom_call.1} parent=1 // pred_region
      _
    $region13: #{tpu_custom_call.1} parent=1 // pred_fallthru
      _
    // Predicated region
    $region14: #{tpu_custom_call.1} parent=1 // pred_check
      _
    $region15: #{tpu_custom_call.1} parent=1 // pred_check_branch
      %24 = sbr.rel (0) target = $region17
    $region16: #{tpu_custom_call.1} parent=1 // pred_region
      _
    $region17: #{tpu_custom_call.1} parent=1 // pred_fallthru
      _
    // Predicated region
    $region18: #{tpu_custom_call.1} parent=1 // pred_check
      _
    $region19: #{tpu_custom_call.1} parent=1 // pred_check_branch
      %26 = sbr.rel (0) target = $region21
    $region20: #{tpu_custom_call.1} parent=1 // pred_region
      _
    $region21: #{tpu_custom_call.1} parent=1 // pred_fallthru
      _
    // Predicated region
    $region22: #{tpu_custom_call.1} parent=1 // pred_check
      _
    $region23: #{tpu_custom_call.1} parent=1 // pred_check_branch
      %28 = sbr.rel (0) target = $region25
    $region24: #{tpu_custom_call.1} parent=1 // pred_region
      _
    $region25: #{tpu_custom_call.1} parent=1 // pred_fallthru
      _
    // Predicated region
    $region26: #{tpu_custom_call.1} parent=1 // pred_check
      _
    $region27: #{tpu_custom_call.1} parent=1 // pred_check_branch
      %30 = sbr.rel (0) target = $region29
    $region28: #{tpu_custom_call.1} parent=1 // pred_region
      _
    $region29: #{tpu_custom_call.1} parent=1 // pred_fallthru
      _
    // Predicated region
    $region30: #{tpu_custom_call.1} parent=1 // pred_check
      _
    $region31: #{tpu_custom_call.1} parent=1 // pred_check_branch
      %32 = sbr.rel (0) target = $region33
    $region32: #{tpu_custom_call.1} parent=1 // pred_region
      _
    $region33: #{tpu_custom_call.1} parent=1 // pred_fallthru
      _
    // Predicated region
    $region34: #{tpu_custom_call.1} parent=1 // pred_check
      _
    $region35: #{tpu_custom_call.1} parent=1 // pred_check_branch
      %34 = sbr.rel (0) target = $region37
    $region36: #{tpu_custom_call.1} parent=1 // pred_region
      _
    $region37: #{tpu_custom_call.1} parent=1 // pred_fallthru
      _
    %v36 = vld [vmem:[%s0] sm:$0xff]
    %v37 = vpack.c.bf16 %v36, %v36
    %v38 = vld [vmem:[%s1] sm:$0xf]
    %v39 = vld [vmem:[%s1 + $0x4] sm:$0xf]
    %v40 = vld [vmem:[%s1 + $0x8] sm:$0xf]
    %v41 = vld [vmem:[%s1 + $0xc] sm:$0xf]
    %v42 = vld [vmem:[%s1 + $0x10] sm:$0xf]
    %v43 = vld [vmem:[%s1 + $0x14] sm:$0xf]
    %v44 = vld [vmem:[%s1 + $0x18] sm:$0xf]
    %v45 = vld [vmem:[%s1 + $0x1c] sm:$0xf]
    %v46 = vld [vmem:[%s1 + $0x20] sm:$0xf]
    %v47 = vld [vmem:[%s1 + $0x24] sm:$0xf]
    %v48 = vld [vmem:[%s1 + $0x28] sm:$0xf]
    %v49 = vld [vmem:[%s1 + $0x2c] sm:$0xf]
    %v50 = vld [vmem:[%s1 + $0x30] sm:$0xf]
    %v51 = vld [vmem:[%s1 + $0x34] sm:$0xf]
    %v52 = vld [vmem:[%s1 + $0x38] sm:$0xf]
    %v53 = vld [vmem:[%s1 + $0x3c] sm:$0xf]
    %v54 = vld [vmem:[%s2] sm:$0xff]
    %v55 = vld [vmem:[%s2 + $0x8] sm:$0xff]
    %v56 = vld [vmem:[%s2 + $0x10] sm:$0xff]
    %v57 = vld [vmem:[%s2 + $0x18] sm:$0xff]
    %v58 = vld [vmem:[%s2 + $0x20] sm:$0xff]
    %v59 = vld [vmem:[%s2 + $0x28] sm:$0xff]
    %v60 = vld [vmem:[%s2 + $0x30] sm:$0xff]
    %v61 = vld [vmem:[%s2 + $0x38] sm:$0xff]
    %v62 = vld [vmem:[%s2 + $0x40] sm:$0xff]
    %v63 = vld [vmem:[%s2 + $0x48] sm:$0xff]
    %v64 = vld [vmem:[%s2 + $0x50] sm:$0xff]
    %v65 = vld [vmem:[%s2 + $0x58] sm:$0xff]
    %v66 = vld [vmem:[%s2 + $0x60] sm:$0xff]
    %v67 = vld [vmem:[%s2 + $0x68] sm:$0xff]
    %v68 = vld [vmem:[%s2 + $0x70] sm:$0xff]
    %v69 = vld [vmem:[%s2 + $0x78] sm:$0xff]
    %71 = vset.pattern.permute.xlu0 0
    %72 = vperm.xlu0 %71, %v54
    %v73 = vpop.permute.xlu0 %72
    %76 = vset.pattern.permute.xlu0 0
    %77 = vperm.xlu0 %76, %v55
    %v78 = vpop.permute.xlu0 %77
    %81 = vset.pattern.permute.xlu0 0
    %82 = vperm.xlu0 %81, %v56
    %v83 = vpop.permute.xlu0 %82
    %86 = vset.pattern.permute.xlu0 0
    %87 = vperm.xlu0 %86, %v57
    %v88 = vpop.permute.xlu0 %87
    %91 = vset.pattern.permute.xlu0 0
    %92 = vperm.xlu0 %91, %v58
    %v93 = vpop.permute.xlu0 %92
    %96 = vset.pattern.permute.xlu0 0
    %97 = vperm.xlu0 %96, %v59
    %v98 = vpop.permute.xlu0 %97
    %101 = vset.pattern.permute.xlu0 0
    %102 = vperm.xlu0 %101, %v60
    %v103 = vpop.permute.xlu0 %102
    %106 = vset.pattern.permute.xlu0 0
    %107 = vperm.xlu0 %106, %v61
    %v108 = vpop.permute.xlu0 %107
    %111 = vset.pattern.permute.xlu0 0
    %112 = vperm.xlu0 %111, %v62
    %v113 = vpop.permute.xlu0 %112
    %116 = vset.pattern.permute.xlu0 0
    %117 = vperm.xlu0 %116, %v63
    %v118 = vpop.permute.xlu0 %117
    %121 = vset.pattern.permute.xlu0 0
    %122 = vperm.xlu0 %121, %v64
    %v123 = vpop.permute.xlu0 %122
    %126 = vset.pattern.permute.xlu0 0
    %127 = vperm.xlu0 %126, %v65
    %v128 = vpop.permute.xlu0 %127
    %131 = vset.pattern.permute.xlu0 0
    %132 = vperm.xlu0 %131, %v66
    %v133 = vpop.permute.xlu0 %132
    %136 = vset.pattern.permute.xlu0 0
    %137 = vperm.xlu0 %136, %v67
    %v138 = vpop.permute.xlu0 %137
    %141 = vset.pattern.permute.xlu0 0
    %142 = vperm.xlu0 %141, %v68
    %v143 = vpop.permute.xlu0 %142
    %146 = vset.pattern.permute.xlu0 0
    %147 = vperm.xlu0 %146, %v69
    %v148 = vpop.permute.xlu0 %147
    %v166 = vunpack.c.l.b16 %v38
    %v167 = vunpack.c.l.b16 %v39
    %v168 = vunpack.c.l.b16 %v40
    %v169 = vunpack.c.l.b16 %v41
    %v170 = vunpack.c.l.b16 %v42
    %v171 = vunpack.c.l.b16 %v43
    %v172 = vunpack.c.l.b16 %v44
    %v173 = vunpack.c.l.b16 %v45
    %v174 = vunpack.c.l.b16 %v46
    %v175 = vunpack.c.l.b16 %v47
    %v176 = vunpack.c.l.b16 %v48
    %v177 = vunpack.c.l.b16 %v49
    %v178 = vunpack.c.l.b16 %v50
    %v179 = vunpack.c.l.b16 %v51
    %v180 = vunpack.c.l.b16 %v52
    %v181 = vunpack.c.l.b16 %v53
    %v182 = vpack.c.b16 %v167, %v166
    %v183 = vpack.c.b16 %v169, %v168
    %v184 = vpack.c.b16 %v171, %v170
    %v185 = vpack.c.b16 %v173, %v172
    %v186 = vpack.c.b16 %v175, %v174
    %v187 = vpack.c.b16 %v177, %v176
    %v188 = vpack.c.b16 %v179, %v178
    %v189 = vpack.c.b16 %v181, %v180
    %vm190 = vcmask 261120
    %v192 = vsel %vm190, %v182, 0
    %v195 = vsel %vm190, %v183, 0
    %v198 = vsel %vm190, %v184, 0
    %v201 = vsel %vm190, %v185, 0
    %v204 = vsel %vm190, %v186, 0
    %v207 = vsel %vm190, %v187, 0
    %v210 = vsel %vm190, %v188, 0
    %v213 = vsel %vm190, %v189, 0
    %v216 = vsel %vm190, %v37, 0
    %218 = vmatprep.subr.bf16.mxu0 0
    %219 = vmatpush1.bf16.xpose.msra.mxu0 %v216
    %220 = vmatprep.subr.bf16.mxu0 0
    %221 = vmatpush1.bf16.xpose.msra.mxu0 0
    %222 = vmatprep.subr.bf16.mxu0 0
    %223 = vmatpush1.bf16.xpose.msra.mxu0 0
    %224 = vmatprep.subr.bf16.mxu0 0
    %225 = vmatpush1.bf16.xpose.msra.mxu0 0
    %226 = vmatprep.subr.bf16.mxu0 0
    %227 = vmatpush1.bf16.xpose.msra.mxu0 0
    %228 = vmatprep.subr.bf16.mxu0 0
    %229 = vmatpush1.bf16.xpose.msra.mxu0 0
    %230 = vmatprep.subr.bf16.mxu0 0
    %231 = vmatpush1.bf16.xpose.msra.mxu0 0
    %232 = vmatprep.subr.bf16.mxu0 0
    %233 = vmatpush1.bf16.xpose.msra.mxu0 0
    %234 = vmatprep.subr.bf16.mxu0 0
    %235 = vmatpush1.bf16.xpose.msra.mxu0 0
    %236 = vmatprep.subr.bf16.mxu0 0
    %237 = vmatpush1.bf16.xpose.msra.mxu0 0
    %238 = vmatprep.subr.bf16.mxu0 0
    %239 = vmatpush1.bf16.xpose.msra.mxu0 0
    %240 = vmatprep.subr.bf16.mxu0 0
    %241 = vmatpush1.bf16.xpose.msra.mxu0 0
    %242 = vmatprep.subr.bf16.mxu0 0
    %243 = vmatpush1.bf16.xpose.msra.mxu0 0
    %244 = vmatprep.subr.bf16.mxu0 0
    %245 = vmatpush1.bf16.xpose.msra.mxu0 0
    %246 = vmatprep.subr.bf16.mxu0 0
    %247 = vmatpush1.bf16.xpose.msra.mxu0 0
    %248 = vmatprep.subr.bf16.mxu0 0
    %249 = vmatpush1.bf16.xpose.msra.mxu0 0
    %250 = vmatprep.mubr.bf16.mxu0 0
    %251 = vmatmul.mubr.bf16.gmra.mrb[0].mxu0 %v192
    %v252 = vpop.f32.mrb[0].mxu0
    %v253 = vadd.f32 %v73, %v252
    %v254 = vpop.f32.mrb[0].mxu0
    %v255 = vpop.f32.mrb[0].mxu0
    %v256 = vadd.f32 %v78, %v255
    %v257 = vpop.f32.mrb[0].mxu0
    %258 = vmatprep.mubr.bf16.mxu0 0
    %259 = vmatmul.mubr.bf16.gmra.mrb[0].mxu0 %v195
    %v260 = vpop.f32.mrb[0].mxu0
    %v261 = vadd.f32 %v83, %v260
    %v262 = vpop.f32.mrb[0].mxu0
    %v263 = vpop.f32.mrb[0].mxu0
    %v264 = vadd.f32 %v88, %v263
    %v265 = vpop.f32.mrb[0].mxu0
    %266 = vmatprep.mubr.bf16.mxu0 0
    %267 = vmatmul.mubr.bf16.gmra.mrb[0].mxu0 %v198
    %v268 = vpop.f32.mrb[0].mxu0
    %v269 = vadd.f32 %v93, %v268
    %v270 = vpop.f32.mrb[0].mxu0
    %v271 = vpop.f32.mrb[0].mxu0
    %v272 = vadd.f32 %v98, %v271
    %v273 = vpop.f32.mrb[0].mxu0
    %274 = vmatprep.mubr.bf16.mxu0 0
    %275 = vmatmul.mubr.bf16.gmra.mrb[0].mxu0 %v201
    %v276 = vpop.f32.mrb[0].mxu0
    %v277 = vadd.f32 %v103, %v276
    %v278 = vpop.f32.mrb[0].mxu0
    %v279 = vpop.f32.mrb[0].mxu0
    %v280 = vadd.f32 %v108, %v279
    %v281 = vpop.f32.mrb[0].mxu0
    %282 = vmatprep.mubr.bf16.mxu0 0
    %283 = vmatmul.mubr.bf16.gmra.mrb[0].mxu0 %v204
    %v284 = vpop.f32.mrb[0].mxu0
    %v285 = vadd.f32 %v113, %v284
    %v286 = vpop.f32.mrb[0].mxu0
    %v287 = vpop.f32.mrb[0].mxu0
    %v288 = vadd.f32 %v118, %v287
    %v289 = vpop.f32.mrb[0].mxu0
    %290 = vmatprep.mubr.bf16.mxu0 0
    %291 = vmatmul.mubr.bf16.gmra.mrb[0].mxu0 %v207
    %v292 = vpop.f32.mrb[0].mxu0
    %v293 = vadd.f32 %v123, %v292
    %v294 = vpop.f32.mrb[0].mxu0
    %v295 = vpop.f32.mrb[0].mxu0
    %v296 = vadd.f32 %v128, %v295
    %v297 = vpop.f32.mrb[0].mxu0
    %298 = vmatprep.mubr.bf16.mxu0 0
    %299 = vmatmul.mubr.bf16.gmra.mrb[0].mxu0 %v210
    %v300 = vpop.f32.mrb[0].mxu0
    %v301 = vadd.f32 %v133, %v300
    %v302 = vpop.f32.mrb[0].mxu0
    %v303 = vpop.f32.mrb[0].mxu0
    %v304 = vadd.f32 %v138, %v303
    %v305 = vpop.f32.mrb[0].mxu0
    %306 = vmatprep.mubr.bf16.mxu0 0
    %307 = vmatmul.mubr.bf16.gmra.mrb[0].mxu0 %v213
    %v308 = vpop.f32.mrb[0].mxu0
    %v309 = vadd.f32 %v143, %v308
    %v310 = vpop.f32.mrb[0].mxu0
    %v311 = vpop.f32.mrb[0].mxu0
    %v312 = vadd.f32 %v148, %v311
    %v313 = vpop.f32.mrb[0].mxu0
    %314 = vdwg.mxu0
    %v315 = vmax.f32 %v253, 0.0
    %v316 = vmax.f32 %v256, 0.0
    %v317 = vmax.f32 %v261, 0.0
    %v318 = vmax.f32 %v264, 0.0
    %v319 = vmax.f32 %v269, 0.0
    %v320 = vmax.f32 %v272, 0.0
    %v321 = vmax.f32 %v277, 0.0
    %v322 = vmax.f32 %v280, 0.0
    %v323 = vmax.f32 %v285, 0.0
    %v324 = vmax.f32 %v288, 0.0
    %v325 = vmax.f32 %v293, 0.0
    %v326 = vmax.f32 %v296, 0.0
    %v327 = vmax.f32 %v301, 0.0
    %v328 = vmax.f32 %v304, 0.0
    %v329 = vmax.f32 %v309, 0.0
    %v330 = vmax.f32 %v312, 0.0
    %v331 = vld [vmem:[%s3] sm:$0xf]
    %v332 = vld [vmem:[%s3 + $0x4] sm:$0xf]
    %v333 = vld [vmem:[%s3 + $0x8] sm:$0xf]
    %v334 = vld [vmem:[%s3 + $0xc] sm:$0xf]
    %v335 = vld [vmem:[%s3 + $0x10] sm:$0xf]
    %v336 = vld [vmem:[%s3 + $0x14] sm:$0xf]
    %v337 = vld [vmem:[%s3 + $0x18] sm:$0xf]
    %v338 = vld [vmem:[%s3 + $0x1c] sm:$0xf]
    %v339 = vpack.c.bf16 %v316, %v315
    %v340 = vpack.c.bf16 %v318, %v317
    %v341 = vpack.c.bf16 %v320, %v319
    %v342 = vpack.c.bf16 %v322, %v321
    %v343 = vpack.c.bf16 %v324, %v323
    %v344 = vpack.c.bf16 %v326, %v325
    %v345 = vpack.c.bf16 %v328, %v327
    %v346 = vpack.c.bf16 %v330, %v329
    %v347 = vld [vmem:[%s4] sm:$0xff]
    %v348 = vld [vmem:[%s4 + $0x8] sm:$0xff]
    %v349 = vld [vmem:[%s4 + $0x10] sm:$0xff]
    %v350 = vld [vmem:[%s4 + $0x18] sm:$0xff]
    %v351 = vld [vmem:[%s4 + $0x20] sm:$0xff]
    %v352 = vld [vmem:[%s4 + $0x28] sm:$0xff]
    %v353 = vld [vmem:[%s4 + $0x30] sm:$0xff]
    %v354 = vld [vmem:[%s4 + $0x38] sm:$0xff]
    %356 = vset.pattern.permute.xlu0 0
    %357 = vperm.xlu0 %356, %v347
    %v358 = vpop.permute.xlu0 %357
    %361 = vset.pattern.permute.xlu0 0
    %362 = vperm.xlu0 %361, %v348
    %v363 = vpop.permute.xlu0 %362
    %366 = vset.pattern.permute.xlu0 0
    %367 = vperm.xlu0 %366, %v349
    %v368 = vpop.permute.xlu0 %367
    %371 = vset.pattern.permute.xlu0 0
    %372 = vperm.xlu0 %371, %v350
    %v373 = vpop.permute.xlu0 %372
    %376 = vset.pattern.permute.xlu0 0
    %377 = vperm.xlu0 %376, %v351
    %v378 = vpop.permute.xlu0 %377
    %381 = vset.pattern.permute.xlu0 0
    %382 = vperm.xlu0 %381, %v352
    %v383 = vpop.permute.xlu0 %382
    %386 = vset.pattern.permute.xlu0 0
    %387 = vperm.xlu0 %386, %v353
    %v388 = vpop.permute.xlu0 %387
    %391 = vset.pattern.permute.xlu0 0
    %392 = vperm.xlu0 %391, %v354
    %v393 = vpop.permute.xlu0 %392
    %v403 = vunpack.c.l.b16 %v331
    %v404 = vunpack.c.l.b16 %v332
    %v405 = vunpack.c.l.b16 %v333
    %v406 = vunpack.c.l.b16 %v334
    %v407 = vunpack.c.l.b16 %v335
    %v408 = vunpack.c.l.b16 %v336
    %v409 = vunpack.c.l.b16 %v337
    %v410 = vunpack.c.l.b16 %v338
    %v411 = vpack.c.b16 %v404, %v403
    %v412 = vpack.c.b16 %v406, %v405
    %v413 = vpack.c.b16 %v408, %v407
    %v414 = vpack.c.b16 %v410, %v409
    %419 = vmatprep.subr.bf16.mxu0 0
    %420 = vmatpush1.bf16.msra.mxu0 %v339
    %421 = vmatprep.subr.bf16.mxu0 0
    %422 = vmatpush1.bf16.msra.mxu0 %v340
    %423 = vmatprep.subr.bf16.mxu0 0
    %424 = vmatpush1.bf16.msra.mxu0 %v341
    %425 = vmatprep.subr.bf16.mxu0 0
    %426 = vmatpush1.bf16.msra.mxu0 %v342
    %427 = vmatprep.subr.bf16.mxu0 0
    %428 = vmatpush1.bf16.msra.mxu0 %v343
    %429 = vmatprep.subr.bf16.mxu0 0
    %430 = vmatpush1.bf16.msra.mxu0 %v344
    %431 = vmatprep.subr.bf16.mxu0 0
    %432 = vmatpush1.bf16.msra.mxu0 %v345
    %433 = vmatprep.subr.bf16.mxu0 0
    %434 = vmatpush1.bf16.msra.mxu0 %v346
    %435 = vmatprep.subr.bf16.mxu0 0
    %436 = vmatpush1.bf16.msra.mxu0 0
    %437 = vmatprep.subr.bf16.mxu0 0
    %438 = vmatpush1.bf16.msra.mxu0 0
    %439 = vmatprep.subr.bf16.mxu0 0
    %440 = vmatpush1.bf16.msra.mxu0 0
    %441 = vmatprep.subr.bf16.mxu0 0
    %442 = vmatpush1.bf16.msra.mxu0 0
    %443 = vmatprep.subr.bf16.mxu0 0
    %444 = vmatpush1.bf16.msra.mxu0 0
    %445 = vmatprep.subr.bf16.mxu0 0
    %446 = vmatpush1.bf16.msra.mxu0 0
    %447 = vmatprep.subr.bf16.mxu0 0
    %448 = vmatpush1.bf16.msra.mxu0 0
    %449 = vmatprep.subr.bf16.mxu0 0
    %450 = vmatpush1.bf16.msra.mxu0 0
    %451 = vmatprep.mubr.bf16.mxu0 0
    %452 = vmatmul.mubr.bf16.gmra.mrb[0].mxu0 %v411
    %v453 = vpop.f32.mrb[0].mxu0
    %v454 = vadd.f32 %v358, %v453
    %v455 = vpop.f32.mrb[0].mxu0
    %v456 = vpop.f32.mrb[0].mxu0
    %v457 = vadd.f32 %v363, %v456
    %v458 = vpop.f32.mrb[0].mxu0
    %459 = vmatprep.mubr.bf16.mxu0 0
    %460 = vmatmul.mubr.bf16.gmra.mrb[0].mxu0 %v412
    %v461 = vpop.f32.mrb[0].mxu0
    %v462 = vadd.f32 %v368, %v461
    %v463 = vpop.f32.mrb[0].mxu0
    %v464 = vpop.f32.mrb[0].mxu0
    %v465 = vadd.f32 %v373, %v464
    %v466 = vpop.f32.mrb[0].mxu0
    %467 = vmatprep.mubr.bf16.mxu0 0
    %468 = vmatmul.mubr.bf16.gmra.mrb[0].mxu0 %v413
    %v469 = vpop.f32.mrb[0].mxu0
    %v470 = vadd.f32 %v378, %v469
    %v471 = vpop.f32.mrb[0].mxu0
    %v472 = vpop.f32.mrb[0].mxu0
    %v473 = vadd.f32 %v383, %v472
    %v474 = vpop.f32.mrb[0].mxu0
    %475 = vmatprep.mubr.bf16.mxu0 0
    %476 = vmatmul.mubr.bf16.gmra.mrb[0].mxu0 %v414
    %v477 = vpop.f32.mrb[0].mxu0
    %v478 = vadd.f32 %v388, %v477
    %v479 = vpop.f32.mrb[0].mxu0
    %v480 = vpop.f32.mrb[0].mxu0
    %v481 = vadd.f32 %v393, %v480
    %v482 = vpop.f32.mrb[0].mxu0
    %483 = vdwg.mxu0
    %v484 = vmax.f32 %v454, 0.0
    %v485 = vmax.f32 %v457, 0.0
    %v486 = vmax.f32 %v462, 0.0
    %v487 = vmax.f32 %v465, 0.0
    %v488 = vmax.f32 %v470, 0.0
    %v489 = vmax.f32 %v473, 0.0
    %v490 = vmax.f32 %v478, 0.0
    %v491 = vmax.f32 %v481, 0.0
    %v492 = vld [vmem:[%s5] sm:$0xf]
    %v493 = vld [vmem:[%s5 + $0x4] sm:$0xf]
    %v494 = vld [vmem:[%s5 + $0x8] sm:$0xf]
    %v495 = vld [vmem:[%s5 + $0xc] sm:$0xf]
    %v496 = vpack.c.bf16 %v485, %v484
    %v497 = vpack.c.bf16 %v487, %v486
    %v498 = vpack.c.bf16 %v489, %v488
    %v499 = vpack.c.bf16 %v491, %v490
    %v500 = vld [vmem:[%s6] sm:$0xff]
    %v501 = vld [vmem:[%s6 + $0x8] sm:$0xff]
    %v502 = vld [vmem:[%s6 + $0x10] sm:$0xff]
    %v503 = vld [vmem:[%s6 + $0x18] sm:$0xff]
    %505 = vset.pattern.permute.xlu0 0
    %506 = vperm.xlu0 %505, %v500
    %v507 = vpop.permute.xlu0 %506
    %510 = vset.pattern.permute.xlu0 0
    %511 = vperm.xlu0 %510, %v501
    %v512 = vpop.permute.xlu0 %511
    %515 = vset.pattern.permute.xlu0 0
    %516 = vperm.xlu0 %515, %v502
    %v517 = vpop.permute.xlu0 %516
    %520 = vset.pattern.permute.xlu0 0
    %521 = vperm.xlu0 %520, %v503
    %v522 = vpop.permute.xlu0 %521
    %v528 = vunpack.c.l.b16 %v492
    %v529 = vunpack.c.l.b16 %v493
    %v530 = vunpack.c.l.b16 %v494
    %v531 = vunpack.c.l.b16 %v495
    %v532 = vpack.c.b16 %v529, %v528
    %v533 = vpack.c.b16 %v531, %v530
    %vm534 = vcmask 523264
    %v536 = vsel %vm534, %v532, 0
    %v539 = vsel %vm534, %v533, 0
    %541 = vmatprep.subr.bf16.mxu0 0
    %542 = vmatpush1.bf16.msra.mxu0 %v496
    %543 = vmatprep.subr.bf16.mxu0 0
    %544 = vmatpush1.bf16.msra.mxu0 %v497
    %545 = vmatprep.subr.bf16.mxu0 0
    %546 = vmatpush1.bf16.msra.mxu0 %v498
    %547 = vmatprep.subr.bf16.mxu0 0
    %548 = vmatpush1.bf16.msra.mxu0 %v499
    %549 = vmatprep.subr.bf16.mxu0 0
    %550 = vmatpush1.bf16.msra.mxu0 0
    %551 = vmatprep.subr.bf16.mxu0 0
    %552 = vmatpush1.bf16.msra.mxu0 0
    %553 = vmatprep.subr.bf16.mxu0 0
    %554 = vmatpush1.bf16.msra.mxu0 0
    %555 = vmatprep.subr.bf16.mxu0 0
    %556 = vmatpush1.bf16.msra.mxu0 0
    %557 = vmatprep.subr.bf16.mxu0 0
    %558 = vmatpush1.bf16.msra.mxu0 0
    %559 = vmatprep.subr.bf16.mxu0 0
    %560 = vmatpush1.bf16.msra.mxu0 0
    %561 = vmatprep.subr.bf16.mxu0 0
    %562 = vmatpush1.bf16.msra.mxu0 0
    %563 = vmatprep.subr.bf16.mxu0 0
    %564 = vmatpush1.bf16.msra.mxu0 0
    %565 = vmatprep.subr.bf16.mxu0 0
    %566 = vmatpush1.bf16.msra.mxu0 0
    %567 = vmatprep.subr.bf16.mxu0 0
    %568 = vmatpush1.bf16.msra.mxu0 0
    %569 = vmatprep.subr.bf16.mxu0 0
    %570 = vmatpush1.bf16.msra.mxu0 0
    %571 = vmatprep.subr.bf16.mxu0 0
    %572 = vmatpush1.bf16.msra.mxu0 0
    %573 = vmatprep.mubr.bf16.mxu0 0
    %574 = vmatmul.mubr.bf16.gmra.mrb[0].mxu0 %v536
    %v575 = vpop.f32.mrb[0].mxu0
    %v576 = vadd.f32 %v507, %v575
    %v577 = vpop.f32.mrb[0].mxu0
    %v578 = vpop.f32.mrb[0].mxu0
    %v579 = vadd.f32 %v512, %v578
    %v580 = vpop.f32.mrb[0].mxu0
    %581 = vmatprep.mubr.bf16.mxu0 0
    %582 = vmatmul.mubr.bf16.gmra.mrb[0].mxu0 %v539
    %v583 = vpop.f32.mrb[0].mxu0
    %v584 = vadd.f32 %v517, %v583
    %v585 = vpop.f32.mrb[0].mxu0
    %v586 = vpop.f32.mrb[0].mxu0
    %v587 = vadd.f32 %v522, %v586
    %v588 = vpop.f32.mrb[0].mxu0
    %589 = vdwg.mxu0
    %v590 = vmax.f32 %v576, 0.0
    %v591 = vmax.f32 %v579, 0.0
    %v592 = vmax.f32 %v584, 0.0
    %v593 = vmax.f32 %v587, 0.0
    %v594 = vld [vmem:[%s7] sm:$0xff]
    %v595 = vld [vmem:[%s7 + $0x8] sm:$0xff]
    %v596 = vld [vmem:[%s7 + $0x10] sm:$0xff]
    %v597 = vld [vmem:[%s7 + $0x18] sm:$0xff]
    %599 = vset.pattern.permute.xlu0 0
    %600 = vperm.xlu0 %599, %v594
    %v601 = vpop.permute.xlu0 %600
    %604 = vset.pattern.permute.xlu0 0
    %605 = vperm.xlu0 %604, %v595
    %v606 = vpop.permute.xlu0 %605
    %609 = vset.pattern.permute.xlu0 0
    %610 = vperm.xlu0 %609, %v596
    %v611 = vpop.permute.xlu0 %610
    %614 = vset.pattern.permute.xlu0 0
    %615 = vperm.xlu0 %614, %v597
    %v616 = vpop.permute.xlu0 %615
    %v618 = vmul.f32 %v590, %v601
    %v619 = vmul.f32 %v591, %v606
    %v620 = vmul.f32 %v592, %v611
    %v621 = vmul.f32 %v593, %v616
    %vm622 = vcmask 64512
    %v623 = vsel %vm622, %v618, 0.0
    %v624 = vsel %vm622, %v619, 0.0
    %v625 = vadd.f32 %v623, %v624
    %v626 = vsel %vm622, %v620, 0.0
    %v627 = vadd.f32 %v625, %v626
    %v628 = vsel %vm622, %v621, 0.0
    %v629 = vadd.f32 %v627, %v628
    %v630 = vrot.slane %v629, 4
    %v631 = vadd.f32 %v629, %v630
    %v632 = vrot.slane %v631, 2
    %v633 = vadd.f32 %v631, %v632
    %v634 = vrot.slane %v633, 1
    %v635 = vadd.f32 %v633, %v634
    %v636 = vld [vmem:[#allocation2] sm:$0x1]
    %638 = vset.pattern.permute.xlu0 0
    %639 = vperm.xlu0 %638, %v636
    %v640 = vpop.permute.xlu0 %639
    %v642 = vlaneseq
    %v643 = vshrl.u32 %v642, 7
    %v644 = vsub.s32 0, %v643
    %v645 = vrot.slane %v640, %v644
    %v646 = vadd.f32 %v635, %v645
    %vm647 = vcmask 57344
    %648 = vst.msk [vmem:[#allocation3] sm:$0x1] %vm647, %v646
    // Predicated region
    $region38: #{tpu_custom_call.1} parent=1 // pred_check
      _
    $region39: #{tpu_custom_call.1} parent=1 // pred_check_branch
      %650 = sbr.rel (0) target = $region41
    $region40: #{tpu_custom_call.1} parent=1 // pred_region
      %s652 = ssub.s32 16, 16
      %653 = vsyncadd [#allocation4], %s652
      %s655 = sshll.u32 [#allocation3], 4
      %s656 = int_to_ptr.vmem [resolvable:$true] %s655
      %658 = dma.vmem_to_hbm [thread:$0]  %s656, 16, %s9, [#allocation4]
    $region41: #{tpu_custom_call.1} parent=1 // pred_fallthru
      _
    // Predicated region
    $region42: #{tpu_custom_call.1} parent=1 // pred_check
      _
    $region43: #{tpu_custom_call.1} parent=1 // pred_check_branch
      %660 = sbr.rel (0) target = $region45
    $region44: #{tpu_custom_call.1} parent=1 // pred_region
      %661 = dma.done [#allocation4], 16
    $region45: #{tpu_custom_call.1} parent=1 // pred_fallthru
      _
    %662 = vsyncpa [#allocation4], 1

</llo_original>
